<compile_context>
chip_gen: v7x
topology: tpu7x:2x2x1
jax: 0.10.0
libtpu: 0.0.40
codegen_flags: <defaults>
</compile_context>

<pallas_src>
import functools

import jax
import jax.numpy as jnp
from jax import lax
from jax.experimental import pallas as pl
from jax.experimental.pallas import tpu as pltpu

d_k = d_v = 64
d_model = 768
n_heads = 8

_NEG_INF = jnp.float32(-1e9)


def _vmem_limit_bytes():
    cap = 128 * 1024 * 1024
    try:
        info = pltpu.get_tpu_info()
        cap = int(getattr(info, "vmem_capacity_bytes", cap))
    except Exception:
        pass
    # 3/4 of physical, capped at 96 MiB, floored at 32 MiB.
    return int(max(32 * 1024 * 1024, min(96 * 1024 * 1024, (cap * 3) // 4)))


_VMEM_LIMIT = _vmem_limit_bytes()


# ----------------------------- matmul kernel --------------------------------
def _matmul_kernel(x_ref, w_ref, o_ref):
    o_ref[...] = jnp.dot(x_ref[...], w_ref[...],
                         preferred_element_type=jnp.float32).astype(o_ref.dtype)


def pallas_matmul(x, w, *, tm=512, tn_cap=512, out_dtype=jnp.float32):
    """x: (M, K) @ w: (K, N) -> (M, N) with f32 MXU accumulation.

    2-D ("parallel", "parallel") grid over M and N: both v7x TensorCores stay
    busy even for small M, and the resident W block stays small. M is padded
    to a multiple of 8 so the sublane constraint always holds (no
    un-pipelined full-matrix fallback for irregular M).
    """
    M, K = x.shape
    K2, N = w.shape
    assert K == K2
    pad = (-M) % 8
    if pad:
        x = jnp.pad(x, ((0, pad), (0, 0)))
    Mp = M + pad
    tm = min(tm, Mp)

    tn = N
    if N % 128 == 0:
        for cand in (tn_cap, 384, 256, 128):
            if cand <= tn_cap and N % cand == 0:
                tn = cand
                break

    out = pl.pallas_call(
        _matmul_kernel,
        grid=(pl.cdiv(Mp, tm), N // tn),
        in_specs=[pl.BlockSpec((tm, K), lambda i, j: (i, 0)),
                  pl.BlockSpec((K, tn), lambda i, j: (0, j))],
        out_specs=pl.BlockSpec((tm, tn), lambda i, j: (i, j)),
        out_shape=jax.ShapeDtypeStruct((Mp, N), out_dtype),
        compiler_params=pltpu.CompilerParams(
            dimension_semantics=("parallel", "parallel"),
            vmem_limit_bytes=_VMEM_LIMIT),
    )(x, w)
    return out[:M] if pad else out


# --------------------------- attention kernels --------------------------------
def _attn_full_kernel(q_ref, k_ref, v_ref, bias_ref, o_ref, *maybe_w_ref,
                      compute_dtype, approx_recip):
    """Full-k attention (exact weights available). Refs (batch squeezed):
    q (tq,H,dk), k (kl,H,dk), v (kl,H,dv), bias (tq,kl), o (tq,H*dv),
    optional w (H,tq,kl)."""
    w_ref = maybe_w_ref[0] if maybe_w_ref else None
    tq, H, dk = q_ref.shape
    dv = v_ref.shape[-1]

    # Fold 1/sqrt(d_k) into q; MXU inputs in compute_dtype (bf16 fast path).
    q = (q_ref[...] * (1.0 / dk ** 0.5)).astype(compute_dtype)     # (tq, H, dk)
    k = k_ref[...].astype(compute_dtype)                           # (kl, H, dk)
    v = v_ref[...].astype(compute_dtype)                           # (kl, H, dv)

    # scores[h,q,k]: head axis as a batch dim -> no head-major transposes.
    scores = lax.dot_general(q, k, (((2,), (2,)), ((1,), (1,))),
                             preferred_element_type=jnp.float32)   # (H, tq, kl)
    scores = scores + bias_ref[...].astype(jnp.float32)[None, :, :]

    scores = scores - jnp.max(scores, axis=-1, keepdims=True)
    e = jnp.exp(scores)
    s = jnp.sum(e, axis=-1, keepdims=True)
    if approx_recip:
        weights = e * pl.reciprocal(s, approx=True)
    else:
        weights = e / s
    if w_ref is not None:
        w_ref[...] = weights

    out = lax.dot_general(weights.astype(compute_dtype), v,
                          (((2,), (0,)), ((0,), (1,))),
                          preferred_element_type=jnp.float32)      # (H, tq, dv)
    # (H, tq, dv) -> (tq, H*dv): lane-dense (512-lane) unmasked store.
    o_ref[...] = jnp.transpose(out, (1, 0, 2)).reshape(tq, H * dv).astype(o_ref.dtype)


def _attn_flash_kernel(q_ref, k_ref, v_ref, bias_ref, o_ref,
                       m_sc, l_sc, acc_sc, *, compute_dtype, approx_recip):
    """Flash-style k-tiled online softmax (return_weights=False path)."""
    ki = pl.program_id(2)
    tq, H, dk = q_ref.shape
    dv = v_ref.shape[-1]

    @pl.when(ki == 0)
    def _():
        m_sc[...] = jnp.full_like(m_sc, -jnp.inf)
        l_sc[...] = jnp.zeros_like(l_sc)
        acc_sc[...] = jnp.zeros_like(acc_sc)

    q = (q_ref[...] * (1.0 / dk ** 0.5)).astype(compute_dtype)     # (tq, H, dk)
    k = k_ref[...].astype(compute_dtype)                           # (tk, H, dk)
    v = v_ref[...].astype(compute_dtype)                           # (tk, H, dv)

    s = lax.dot_general(q, k, (((2,), (2,)), ((1,), (1,))),
                        preferred_element_type=jnp.float32)        # (H, tq, tk)
    s = s + bias_ref[...].astype(jnp.float32)[None, :, :]

    m_prev = m_sc[...]                                             # (H, tq, 1)
    m_new = jnp.maximum(m_prev, jnp.max(s, axis=-1, keepdims=True))
    alpha = jnp.exp(m_prev - m_new)
    p = jnp.exp(s - m_new)
    l_sc[...] = alpha * l_sc[...] + jnp.sum(p, axis=-1, keepdims=True)
    acc_sc[...] = alpha * acc_sc[...] + lax.dot_general(
        p.astype(compute_dtype), v, (((2,), (0,)), ((0,), (1,))),
        preferred_element_type=jnp.float32)                        # (H, tq, dv)
    m_sc[...] = m_new

    @pl.when(ki == pl.num_programs(2) - 1)
    def _():
        l = l_sc[...]
        inv = pl.reciprocal(l, approx=True) if approx_recip else 1.0 / l
        out = acc_sc[...] * inv
        o_ref[...] = jnp.transpose(out, (1, 0, 2)).reshape(tq, H * dv).astype(o_ref.dtype)


def _pick_tq(q_len, k_len, H, dk, dv):
    """Largest q tile whose O(tq * k_len) working set fits the VMEM budget."""
    if q_len <= 256:
        return q_len
    budget = (_VMEM_LIMIT * 3) // 4
    kv_bytes = 2 * 2 * k_len * H * max(dk, dv) * 4       # double-buffered k & v
    for tq in (256, 128, 64, 32, 16, 8):
        live = kv_bytes + 6 * H * tq * k_len * 4 + 4 * tq * H * dv * 4
        if live <= budget:
            return tq
    return 8


def pallas_attention(qkv, mask_bias, *, return_weights=True, precision="bf16",
                     flash=None, q_tile=None, k_tile=None):
    """All-heads-per-grid-step multi-head attention.

    qkv: either a fused (bs, seq, 3, H, d) array (self-attention — q/k/v are
         read straight from the fused QKV matmul via three BlockSpecs on the
         same array, no host-side slice copies) or a tuple of three
         (bs, seq, H, d) arrays (cross-attention).
    mask_bias: (bs, q_len, k_len) additive bias, 0 kept / -1e9 masked (bf16).
    Returns (output (bs, q_len, H*d_v), weights (bs, H, q_len, k_len) | None).
    """
    fused = not isinstance(qkv, (tuple, list))
    if fused:
        bs, q_len, three, H, dk = qkv.shape
        assert three == 3
        k_len, dv = q_len, dk
    else:
        q_heads, k_heads, v_heads = qkv
        bs, q_len, H, dk = q_heads.shape
        k_len = k_heads.shape[1]
        dv = v_heads.shape[-1]

    compute_dtype = jnp.bfloat16 if precision == "bf16" else jnp.float32
    approx_recip = precision == "bf16"
    out_dtype = compute_dtype

    if flash is None:
        flash = (not return_weights) and k_len % 128 == 0 and k_len >= 1024
    if return_weights:
        flash = False          # exact full attention weights need full-k path

    if q_tile is not None:
        tq = q_tile
    elif flash:
        tq = min(256, q_len)
    else:
        tq = _pick_tq(q_len, k_len, H, dk, dv)
    n_q = pl.cdiv(q_len, tq)

    if flash:
        if k_tile is not None:
            tk = k_tile
        else:
            tk = k_len
            for cand in (512, 256, 128):
                if k_len % cand == 0:
                    tk = cand
                    break
        assert k_len % tk == 0, "flash path requires k_len % k_tile == 0"
        n_k = k_len // tk

        if fused:
            in_specs = [
                pl.BlockSpec((None, tq, None, H, dk), lambda b, qi, ki: (b, qi, 0, 0, 0)),
                pl.BlockSpec((None, tk, None, H, dk), lambda b, qi, ki: (b, ki, 1, 0, 0)),
                pl.BlockSpec((None, tk, None, H, dv), lambda b, qi, ki: (b, ki, 2, 0, 0)),
            ]
            operands = (qkv, qkv, qkv)
        else:
            in_specs = [
                pl.BlockSpec((None, tq, H, dk), lambda b, qi, ki: (b, qi, 0, 0)),
                pl.BlockSpec((None, tk, H, dk), lambda b, qi, ki: (b, ki, 0, 0)),
                pl.BlockSpec((None, tk, H, dv), lambda b, qi, ki: (b, ki, 0, 0)),
            ]
            operands = (q_heads, k_heads, v_heads)
        in_specs.append(pl.BlockSpec((None, tq, tk), lambda b, qi, ki: (b, qi, ki)))

        kernel = functools.partial(_attn_flash_kernel,
                                   compute_dtype=compute_dtype,
                                   approx_recip=approx_recip)
        out = pl.pallas_call(
            kernel,
            grid=(bs, n_q, n_k),
            in_specs=in_specs,
            out_specs=pl.BlockSpec((None, tq, H * dv), lambda b, qi, ki: (b, qi, 0)),
            out_shape=jax.ShapeDtypeStruct((bs, q_len, H * dv), out_dtype),
            scratch_shapes=[pltpu.VMEM((H, tq, 1), jnp.float32),
                            pltpu.VMEM((H, tq, 1), jnp.float32),
                            pltpu.VMEM((H, tq, dv), jnp.float32)],
            compiler_params=pltpu.CompilerParams(
                dimension_semantics=("parallel", "parallel", "arbitrary"),
                vmem_limit_bytes=_VMEM_LIMIT),
        )(*operands, mask_bias)
        return out, None

    # ----- full-k path (supports exact attention-weights output) -----
    if fused:
        in_specs = [
            pl.BlockSpec((None, tq, None, H, dk), lambda b, qi: (b, qi, 0, 0, 0)),
            pl.BlockSpec((None, k_len, None, H, dk), lambda b, qi: (b, 0, 1, 0, 0)),
            pl.BlockSpec((None, k_len, None, H, dv), lambda b, qi: (b, 0, 2, 0, 0)),
        ]
        operands = (qkv, qkv, qkv)
    else:
        in_specs = [
            pl.BlockSpec((None, tq, H, dk), lambda b, qi: (b, qi, 0, 0)),
            pl.BlockSpec((None, k_len, H, dk), lambda b, qi: (b, 0, 0, 0)),
            pl.BlockSpec((None, k_len, H, dv), lambda b, qi: (b, 0, 0, 0)),
        ]
        operands = (q_heads, k_heads, v_heads)
    in_specs.append(pl.BlockSpec((None, tq, k_len), lambda b, qi: (b, qi, 0)))

    out_specs = [pl.BlockSpec((None, tq, H * dv), lambda b, qi: (b, qi, 0))]
    out_shapes = [jax.ShapeDtypeStruct((bs, q_len, H * dv), out_dtype)]
    if return_weights:
        out_specs.append(pl.BlockSpec((None, H, tq, k_len), lambda b, qi: (b, 0, qi, 0)))
        out_shapes.append(jax.ShapeDtypeStruct((bs, H, q_len, k_len), jnp.float32))

    kernel = functools.partial(_attn_full_kernel,
                               compute_dtype=compute_dtype,
                               approx_recip=approx_recip)
    outs = pl.pallas_call(
        kernel,
        grid=(bs, n_q),
        in_specs=in_specs,
        out_specs=out_specs,
        out_shape=out_shapes,
        compiler_params=pltpu.CompilerParams(
            dimension_semantics=("parallel", "parallel"),
            vmem_limit_bytes=_VMEM_LIMIT),
    )(*operands, mask_bias)
    if return_weights:
        return outs[0], outs[1]
    return outs[0], None


# --------------------------- MultiAttention forward ---------------------------
def init_params(key):
    kq, kk, kv, ko = jax.random.split(key, 4)
    scale = 0.02
    # Stored as (in_features, out_features) so projection is x @ W.
    p = {
        "Wq": scale * jax.random.normal(kq, (d_model, n_heads * d_k), jnp.float32),
        "Wk": scale * jax.random.normal(kk, (d_model, n_heads * d_k), jnp.float32),
        "Wv": scale * jax.random.normal(kv, (d_model, n_heads * d_v), jnp.float32),
        "Wo": scale * jax.random.normal(ko, (n_heads * d_v, d_model), jnp.float32),
    }
    # Fused QKV weight precomputed once (avoids a 4.5 MiB HBM concat per call).
    p["Wqkv"] = jnp.concatenate([p["Wq"], p["Wk"], p["Wv"]], axis=1)
    return p


def multi_attention(params, q, k, v, mask, *, return_weights=True,
                    precision="bf16", flash=None, q_tile=None, k_tile=None):
    """Forward pass of the PyTorch MultiAttention module.

    precision="bf16" (default): MXU inputs in bf16 with f32 accumulation
    (2-3x faster on v6e/v7x, ~1e-3-relative numerics).
    precision="f32": exact float32 path.
    """
    # TODO(synk): training-mode dropout (p=0.1) on attention weights is not implemented.
    bs, q_len, _ = q.shape
    k_len = k.shape[1]
    v_len = v.shape[1]
    compute_dtype = jnp.bfloat16 if precision == "bf16" else jnp.float32

    def cast(a):
        return a.astype(compute_dtype)

    # Additive mask bias: half the DMA bytes of f32 and a single vadd in-kernel.
    mask_bias = jnp.where(mask, _NEG_INF, jnp.float32(0.0)).astype(jnp.bfloat16)

    if q is k and k is v and d_k == d_v:
        # Self-attention: one fused lane-dense QKV matmul; the result is
        # reshaped (metadata-only) to (bs, seq, 3, H, d) — no slice copies.
        w_qkv = params.get("Wqkv")
        if w_qkv is None:
            w_qkv = jnp.concatenate([params["Wq"], params["Wk"], params["Wv"]], axis=1)
        qkv = pallas_matmul(cast(q.reshape(bs * q_len, d_model)), cast(w_qkv),
                            out_dtype=compute_dtype)
        attn_in = qkv.reshape(bs, q_len, 3, n_heads, d_k)
    else:
        q_proj = pallas_matmul(cast(q.reshape(bs * q_len, d_model)),
                               cast(params["Wq"]), out_dtype=compute_dtype)
        k_proj = pallas_matmul(cast(k.reshape(bs * k_len, d_model)),
                               cast(params["Wk"]), out_dtype=compute_dtype)
        v_proj = pallas_matmul(cast(v.reshape(bs * v_len, d_model)),
                               cast(params["Wv"]), out_dtype=compute_dtype)
        attn_in = (q_proj.reshape(bs, q_len, n_heads, d_k),
                   k_proj.reshape(bs, k_len, n_heads, d_k),
                   v_proj.reshape(bs, v_len, n_heads, d_v))

    attn_flat, attn_weights = pallas_attention(
        attn_in, mask_bias, return_weights=return_weights,
        precision=precision, flash=flash, q_tile=q_tile, k_tile=k_tile)

    # attn_flat is already (bs, q_len, H*d_v) -> output projection directly.
    output = pallas_matmul(attn_flat.reshape(bs * q_len, n_heads * d_v),
                           cast(params["Wo"])).reshape(bs, q_len, d_model)
    return output, attn_weights


# ------------------------------ reference (jnp) -------------------------------
def multi_attention_ref(params, q, k, v, mask):
    bs, q_len, _ = q.shape
    k_len = k.shape[1]
    qh = (q @ params["Wq"]).reshape(bs, q_len, n_heads, d_k).transpose(0, 2, 1, 3)
    kh = (k @ params["Wk"]).reshape(bs, k_len, n_heads, d_k).transpose(0, 2, 1, 3)
    vh = (v @ params["Wv"]).reshape(bs, k_len, n_heads, d_v).transpose(0, 2, 1, 3)
    scores = jnp.einsum("bhqd,bhkd->bhqk", qh, kh) / (d_k ** 0.5)
    scores = jnp.where(mask[:, None, :, :], -1e9, scores)
    w = jax.nn.softmax(scores, axis=-1)
    out = jnp.einsum("bhqk,bhkd->bhqd", w, vh)
    out = out.transpose(0, 2, 1, 3).reshape(bs, q_len, n_heads * d_v)
    return out @ params["Wo"], w


if __name__ == "__main__":
    key = jax.random.PRNGKey(0)
    kp, kx, kq, kk, kv, kx2 = jax.random.split(key, 6)

    bs, seq = 2, 8
    params = init_params(kp)

    # causal-style boolean mask: True => position is masked out
    mask = jnp.triu(jnp.ones((seq, seq), dtype=bool), k=1)[None].repeat(bs, axis=0)
    x = jax.random.normal(kx, (bs, seq, d_model), jnp.float32)
    ref_out, ref_w = multi_attention_ref(params, x, x, x, mask)

    # --- self-attention, exact f32 path (fused QKV projection) ---
    out, weights = multi_attention(params, x, x, x, mask, precision="f32")
    jax.block_until_ready(out)
    assert jnp.allclose(out, ref_out, atol=1e-3, rtol=1e-3)
    assert jnp.allclose(weights, ref_w, atol=1e-4, rtol=1e-3)

    # --- self-attention, bf16 MXU fast path (default) ---
    out_bf, w_bf = multi_attention(params, x, x, x, mask)
    jax.block_until_ready(out_bf)
    assert jnp.allclose(out_bf, ref_out, atol=1e-2, rtol=1e-2)
    assert jnp.allclose(w_bf, ref_w, atol=1e-2, rtol=1e-2)

    # --- cross-attention (separate projection path), exact f32 ---
    q = jax.random.normal(kq, (bs, seq, d_model), jnp.float32)
    k = jax.random.normal(kk, (bs, seq, d_model), jnp.float32)
    v = jax.random.normal(kv, (bs, seq, d_model), jnp.float32)
    out2, w2 = multi_attention(params, q, k, v, mask, precision="f32")
    jax.block_until_ready(out2)
    ref_out2, ref_w2 = multi_attention_ref(params, q, k, v, mask)
    assert jnp.allclose(out2, ref_out2, atol=1e-3, rtol=1e-3)
    assert jnp.allclose(w2, ref_w2, atol=1e-4, rtol=1e-3)

    # --- weights-free fast path (skips the O(bs*H*S^2) HBM writeback) ---
    out3, w3 = multi_attention(params, x, x, x, mask, precision="f32",
                               return_weights=False)
    jax.block_until_ready(out3)
    assert w3 is None
    assert jnp.allclose(out3, ref_out, atol=1e-3, rtol=1e-3)

    # --- flash (k-tiled online-softmax) path, multiple k steps (seq=256, tk=128) ---
    seq2 = 256
    x2 = jax.random.normal(kx2, (bs, seq2, d_model), jnp.float32)
    mask2 = jnp.triu(jnp.ones((seq2, seq2), dtype=bool), k=1)[None].repeat(bs, axis=0)
    ref_out4, _ = multi_attention_ref(params, x2, x2, x2, mask2)
    out4, w4 = multi_attention(params, x2, x2, x2, mask2, precision="f32",
                               return_weights=False, flash=True, k_tile=128)
    jax.block_until_ready(out4)
    assert w4 is None
    assert jnp.allclose(out4, ref_out4, atol=1e-3, rtol=1e-3)

    print("KERNEL_OK")
</pallas_src>

<mosaic_0001>
module attributes {stable_mosaic.version = 11 : i64} {
  func.func @_matmul_kernel(%arg0: i32, %arg1: i32, %arg2: memref<16x768xf32, #tpu.memory_space<vmem>>, %arg3: memref<768x512xf32, #tpu.memory_space<vmem>>, %arg4: memref<16x512xf32, #tpu.memory_space<vmem>>) attributes {dimension_semantics = [#tpu.dimension_semantics<parallel>, #tpu.dimension_semantics<parallel>], iteration_bounds = array<i64: 1, 3>, scalar_prefetch = 0 : i64, scratch_operands = 0 : i64, tpu.core_type = #tpu.core_type<tc>, window_params = [{transform_indices = @transform_0, window_bounds = array<i64: 16, 768>}, {transform_indices = @transform_1, window_bounds = array<i64: 768, 512>}, {transform_indices = @transform_2, window_bounds = array<i64: 16, 512>}]} {
    %c0 = arith.constant 0 : index
    %c0_0 = arith.constant 0 : index
    %0 = vector.load %arg2[%c0, %c0_0] : memref<16x768xf32, #tpu.memory_space<vmem>>, vector<16x768xf32>
    %c0_1 = arith.constant 0 : index
    %c0_2 = arith.constant 0 : index
    %1 = vector.load %arg3[%c0_1, %c0_2] : memref<768x512xf32, #tpu.memory_space<vmem>>, vector<768x512xf32>
    %cst = arith.constant dense<0.000000e+00> : vector<16x512xf32>
    %2 = tpu.matmul %0, %1, %cst {dimension_numbers = #tpu.dot_dimension_numbers<[1], [0], [0], [1], [0, 0, 1, 1], [], []>} : vector<16x768xf32>, vector<768x512xf32>, vector<16x512xf32> -> vector<16x512xf32>
    %c0_3 = arith.constant 0 : index
    %c0_4 = arith.constant 0 : index
    %3 = vector.load %arg4[%c0_3, %c0_4] : memref<16x512xf32, #tpu.memory_space<vmem>>, vector<16x512xf32>
    tpu.vector_store %arg4[%c0_3, %c0_4], %2 {strides = array<i32>} : memref<16x512xf32, #tpu.memory_space<vmem>>, vector<16x512xf32>,
    return
  }
  func.func @transform_0(%arg0: i32, %arg1: i32) -> (i32, i32) {
    %c0_i32 = arith.constant 0 : i32
    %c0_i32_0 = arith.constant 0 : i32
    return %arg0, %c0_i32 : i32, i32
  }
  func.func @transform_1(%arg0: i32, %arg1: i32) -> (i32, i32) {
    %c0_i32 = arith.constant 0 : i32
    %c0_i32_0 = arith.constant 0 : i32
    return %c0_i32, %arg1 : i32, i32
  }
  func.func @transform_2(%arg0: i32, %arg1: i32) -> (i32, i32) {
    %c0_i32 = arith.constant 0 : i32
    return %arg0, %arg1 : i32, i32
  }
}

</mosaic_0001>

<llo_original>
// kernel: tpu_custom_call.1
$region0: #{tpu_custom_call.1}
  #allocation0 [shape = 'u32[]', space=smem, size = 0x4, offset = 0x4, fixed_abs, tag = 'smem constant byte address 0x4 - core index']
  #allocation1 [shape = 'u32[144,128]{1,0:T(1,128)}', space=vmem, size = 0x12000, scoped, tag = 'internal scratch']
  %s0 = inlined_call_operand.hbm [shape: f32[16,768], index: 0, kind: input, shape index: {}]
  %s1 = inlined_call_operand.hbm [shape: f32[768,1536], index: 1, kind: input, shape index: {}]
  %s2 = inlined_call_operand.hbm [shape: f32[16,1536], index: 2, kind: output, shape index: {}]
  %s3 = sld [smem:[#allocation0]]
  $region49: #{tpu_custom_call.1} parent=0
    _
  %s5 = ssub.s32 1, %s3
  %s6 = scalar_select 0, %s5, %s3
  $region1: #{tpu_custom_call.1} parent=0
    #allocation2 [shape = 'u8[49152]{0}', space=vmem, size = 0xc000, scoped, tag = 'input window, operand 0, single buffered']
    #allocation3 [shape = 's32[2]{0}', space=sflag, size = 0x8, scoped, tag = 'scoped memory for tpu_custom_call.1']
    #allocation4 [shape = 's32[2]{0}', space=sflag, size = 0x8, scoped, tag = 'scoped memory for tpu_custom_call.1']
    #allocation5 [shape = 'u8[3145728]{0}', space=vmem, size = 0x300000, scoped, tag = 'input window, operand 1']
    #allocation6 [shape = 's32[2]{0}', space=sflag, size = 0x8, scoped, tag = 'scoped memory for tpu_custom_call.1']
    #allocation7 [shape = 'u8[65536]{0}', space=vmem, size = 0x10000, scoped, tag = 'output window, operand 0']
    %7 = vsyncpa [#allocation3], 0
    %8 = vsyncpa [#allocation6], 0
    %s9 = scalar_lea.sflag [#allocation6], 1
    %10 = vsyncpa %s9, 0
    %11 = vsyncpa [#allocation4], 0
    %s12 = scalar_lea.sflag [#allocation4], 1
    %13 = vsyncpa %s12, 0
    loop: start=0, step=1, limit=5
    $region2: #{tpu_custom_call.1} parent=1 // loop_pre_header
      _
    $region3: #{tpu_custom_call.1} parent=1 // loop_header
      %s15 = sphi 0, %s19
      %p16 = scmp.ge.s32.totalorder %s15, 5
      %s22 = sphi 0, %s34
      %s23 = sphi 0, %s30
      %s24 = sphi 0, %s22
      %s25 = sphi 0, %s23
      %s26 = sphi 0, %s24
      %s27 = sphi 0, %s25
      %s37 = sphi 0, %s39
      %s40 = sphi 0, %s37
      %s41 = sphi 0, %s40
      %s57 = sphi 0, %s41
      %s63 = sphi 0, %s65
      %s66 = sphi 0, %s63
      %s67 = sphi 0, %s66
      %s83 = sphi 0, %s67
      %s91 = sphi 0, %s93
      %s94 = sphi 0, %s91
      %s95 = sphi 0, %s94
      %s111 = sphi 0, %s95
    $region4: #{tpu_custom_call.1} parent=1 // loop_header_branch
      %18 = sbr.rel (%p16) target = $region8
    $region5: #{tpu_custom_call.1} parent=1 // loop_body
      %s20 = ssub.s32 %s15, 1
      %s21 = ssub.s32 %s15, 2
      %s28 = sadd.s32 1, %s23
      %p29 = scmp.ge.s32.totalorder %s28, 3
      %s30 = scalar_select %p29, 0, %s28
      %s31 = sadd.s32 1, %s22
      %s32 = scalar_select %p29, %s31, %s22
      %p33 = scmp.ge.s32.totalorder %s32, 1
      %s34 = scalar_select %p33, 0, %s32
      %s35 = ssub.s32 %s22, %s34
      %p36 = scmp.eq.s32.totalorder %s35, 0
      %s38 = sadd.s32 %s37, 1
      %s39 = scalar_select %p36, %s37, %s38
      %p42 = pneg %p36
      %p43 = scmp.eq.s32.totalorder %s15, 2
      %p44 = por %p42, %p43
      %p45 = scmp.ne.s32.totalorder %s37, %s40
      %p46 = scmp.eq.s32.totalorder %s15, 0
      %p47 = por %p45, %p46
      %p48 = scmp.ne.s32.totalorder %s37, %s40
      %p49 = scmp.eq.s32.totalorder %s20, 2
      %p50 = por %p48, %p49
      %p51 = scmp.ne.s32.totalorder %s40, %s41
      %p52 = scmp.eq.s32.totalorder %s20, 0
      %p53 = por %p51, %p52
      %p54 = scmp.ne.s32.totalorder %s40, %s41
      %p55 = scmp.eq.s32.totalorder %s21, 2
      %p56 = por %p54, %p55
      %p58 = scmp.ne.s32.totalorder %s41, %s57
      %p59 = scmp.eq.s32.totalorder %s21, 0
      %p60 = por %p58, %p59
      %s61 = ssub.s32 %s23, %s30
      %p62 = scmp.eq.s32.totalorder %s61, 0
      %s64 = sadd.s32 %s63, 1
      %s65 = scalar_select %p62, %s63, %s64
      %p68 = pneg %p62
      %p69 = scmp.eq.s32.totalorder %s15, 2
      %p70 = por %p68, %p69
      %p71 = scmp.ne.s32.totalorder %s63, %s66
      %p72 = scmp.eq.s32.totalorder %s15, 0
      %p73 = por %p71, %p72
      %p74 = scmp.ne.s32.totalorder %s63, %s66
      %p75 = scmp.eq.s32.totalorder %s20, 2
      %p76 = por %p74, %p75
      %p77 = scmp.ne.s32.totalorder %s66, %s67
      %p78 = scmp.eq.s32.totalorder %s20, 0
      %p79 = por %p77, %p78
      %p80 = scmp.ne.s32.totalorder %s66, %s67
      %p81 = scmp.eq.s32.totalorder %s21, 2
      %p82 = por %p80, %p81
      %p84 = scmp.ne.s32.totalorder %s67, %s83
      %p85 = scmp.eq.s32.totalorder %s21, 0
      %p86 = por %p84, %p85
      %s87 = ssub.s32 %s22, %s34
      %s88 = ssub.s32 %s23, %s30
      %s89 = sor.u32 %s87, %s88
      %p90 = scmp.eq.s32.totalorder %s89, 0
      %s92 = sadd.s32 %s91, 1
      %s93 = scalar_select %p90, %s91, %s92
      %p96 = pneg %p90
      %p97 = scmp.eq.s32.totalorder %s15, 2
      %p98 = por %p96, %p97
      %p99 = scmp.ne.s32.totalorder %s91, %s94
      %p100 = scmp.eq.s32.totalorder %s15, 0
      %p101 = por %p99, %p100
      %p102 = scmp.ne.s32.totalorder %s91, %s94
      %p103 = scmp.eq.s32.totalorder %s20, 2
      %p104 = por %p102, %p103
      %p105 = scmp.ne.s32.totalorder %s94, %s95
      %p106 = scmp.eq.s32.totalorder %s20, 0
      %p107 = por %p105, %p106
      %p108 = scmp.ne.s32.totalorder %s94, %s95
      %p109 = scmp.eq.s32.totalorder %s21, 2
      %p110 = por %p108, %p109
      %p112 = scmp.ne.s32.totalorder %s95, %s111
      %p113 = scmp.eq.s32.totalorder %s21, 0
      %p114 = por %p112, %p113
      %p115 = scmp.le.s32.totalorder 1, %s15
      %p116 = scmp.lt.s32.totalorder %s15, 4
      %p117 = pnand %p115, %p116
      %p118 = pneg %p117
      // Predicated region
      $region9: #{tpu_custom_call.1} parent=5 // pred_check
        _
      $region10: #{tpu_custom_call.1} parent=5 // pred_check_branch
        %120 = sbr.rel (%p117) target = $region12
      $region11: #{tpu_custom_call.1} parent=5 // pred_region
        %s121 = ssub.s32 %s15, 1
        // Predicated region
        $region13: #{tpu_custom_call.1} parent=11 // pred_check
          %p122 = pneg %p53
        $region14: #{tpu_custom_call.1} parent=11 // pred_check_branch
          %124 = sbr.rel (%p122) target = $region16
        $region15: #{tpu_custom_call.1} parent=11 // pred_region
          %s125 = smul.u32 2, %s24
          %s127 = ssub.s32 1536, 1536
          %128 = vsyncadd [#allocation3], %s127
          %s129 = smul.addr %s125, 6
          %s130 = smul.addr %s129, 128
          %s131 = scalar_lea.hbm %s0, %s130
          %s132 = sshll.u32 [#allocation2], 4
          %s133 = int_to_ptr.vmem [resolvable:$true] %s132
          %138 = dma.hbm_to_vmem [thread:$0]  %s131, 1536, %s133, [#allocation3], 768, 768, 48
        $region16: #{tpu_custom_call.1} parent=11 // pred_fallthru
          _
      $region12: #{tpu_custom_call.1} parent=5 // pred_fallthru
        _
      %p139 = scmp.lt.s32.totalorder %s15, 3
      // Predicated region
      $region17: #{tpu_custom_call.1} parent=5 // pred_check
        %p140 = pneg %p139
      $region18: #{tpu_custom_call.1} parent=5 // pred_check_branch
        %142 = sbr.rel (%p140) target = $region20
      $region19: #{tpu_custom_call.1} parent=5 // pred_region
        // Predicated region
        $region21: #{tpu_custom_call.1} parent=19 // pred_check
          %p143 = pneg %p73
        $region22: #{tpu_custom_call.1} parent=19 // pred_check_branch
          %145 = sbr.rel (%p143) target = $region24
        $region23: #{tpu_custom_call.1} parent=19 // pred_region
          %s146 = sand.u32 %s63, 1
          %s147 = scalar_lea.sflag [#allocation6], %s146
          %s148 = sand.u32 %s63, 1
          %s149 = smul.addr %s148, 3072
          %s150 = scalar_lea.vmem [#allocation5], %s149
          %s151 = smul.u32 4, %s23
          %s153 = ssub.s32 49152, 49152
          %154 = vsyncadd %s147, %s153
          %s155 = smul.addr %s151, 128
          %s156 = scalar_lea.hbm %s1, %s155
          %s157 = sshll.u32 %s150, 4
          %s158 = int_to_ptr.vmem [resolvable:$true] %s157
          %163 = dma.hbm_to_vmem [thread:$0]  %s156, 49152, %s158, %s147, 1536, 512, 32
        $region24: #{tpu_custom_call.1} parent=19 // pred_fallthru
          _
      $region20: #{tpu_custom_call.1} parent=5 // pred_fallthru
        _
      %p164 = scmp.le.s32.totalorder 1, %s15
      %p165 = scmp.lt.s32.totalorder %s15, 4
      %p166 = pnand %p164, %p165
      %p167 = pneg %p166
      // Predicated region
      $region25: #{tpu_custom_call.1} parent=5 // pred_check
        _
      $region26: #{tpu_custom_call.1} parent=5 // pred_check_branch
        %169 = sbr.rel (%p166) target = $region28
      $region27: #{tpu_custom_call.1} parent=5 // pred_region
        %s170 = ssub.s32 %s15, 1
        // Predicated region
        $region29: #{tpu_custom_call.1} parent=27 // pred_check
          %p171 = pneg %p53
        $region30: #{tpu_custom_call.1} parent=27 // pred_check_branch
          %173 = sbr.rel (%p171) target = $region32
        $region31: #{tpu_custom_call.1} parent=27 // pred_region
          %174 = dma.done [#allocation3], 1536
        $region32: #{tpu_custom_call.1} parent=27 // pred_fallthru
          _
        %s175 = sand.u32 %s66, 1
        %s176 = scalar_lea.sflag [#allocation6], %s175
        %s177 = sand.u32 %s66, 1
        %s178 = smul.addr %s177, 3072
        %s179 = scalar_lea.vmem [#allocation5], %s178
        // Predicated region
        $region33: #{tpu_custom_call.1} parent=27 // pred_check
          %p180 = pneg %p79
        $region34: #{tpu_custom_call.1} parent=27 // pred_check_branch
          %182 = sbr.rel (%p180) target = $region36
        $region35: #{tpu_custom_call.1} parent=27 // pred_region
          %183 = dma.done %s176, 49152
        $region36: #{tpu_custom_call.1} parent=27 // pred_fallthru
          _
        %p184 = pneg %p53
        %p185 = pneg %p50
        %s186 = sand.u32 %s66, 1
        %s187 = scalar_lea.sflag [#allocation6], %s186
        %s188 = sand.u32 %s66, 1
        %s189 = smul.addr %s188, 3072
        %s190 = scalar_lea.vmem [#allocation5], %s189
        %p191 = pneg %p79
        %p192 = pneg %p76
        %p193 = pneg %p107
        %p194 = pneg %p104
        %s195 = sand.u32 %s94, 1
        %s196 = scalar_lea.sflag [#allocation4], %s195
        %s197 = sand.u32 %s94, 1
        %s198 = smul.addr %s197, 64
        %s199 = scalar_lea.vmem [#allocation7], %s198
        %s200 = smul.u32 2, %s24
        %s201 = smul.u32 4, %s25
        %s202 = smul.u32 2, %s24
        %s203 = smul.u32 4, %s25
        %v204 = vld [vmem:[#allocation2] sm:$0xff]
        %v205 = vld [vmem:[#allocation2 + $0x8] sm:$0xff]
        %v206 = vld [vmem:[#allocation2 + $0x10] sm:$0xff]
        %v207 = vld [vmem:[#allocation2 + $0x18] sm:$0xff]
        %v208 = vld [vmem:[#allocation2 + $0x20] sm:$0xff]
        %v209 = vld [vmem:[#allocation2 + $0x28] sm:$0xff]
        %v210 = vld [vmem:[#allocation2 + $0x30] sm:$0xff]
        %v211 = vld [vmem:[#allocation2 + $0x38] sm:$0xff]
        %v212 = vld [vmem:[#allocation2 + $0x40] sm:$0xff]
        %v213 = vld [vmem:[#allocation2 + $0x48] sm:$0xff]
        %v214 = vld [vmem:[#allocation2 + $0x50] sm:$0xff]
        %v215 = vld [vmem:[#allocation2 + $0x58] sm:$0xff]
        %v216 = vld [vmem:[%s179] sm:$0xff]
        %v217 = vld [vmem:[%s179 + $0x8] sm:$0xff]
        %v218 = vld [vmem:[%s179 + $0x10] sm:$0xff]
        %v219 = vld [vmem:[%s179 + $0x18] sm:$0xff]
        %v220 = vld [vmem:[%s179 + $0x20] sm:$0xff]
        %v221 = vld [vmem:[%s179 + $0x28] sm:$0xff]
        %v222 = vld [vmem:[%s179 + $0x30] sm:$0xff]
        %v223 = vld [vmem:[%s179 + $0x38] sm:$0xff]
        %v224 = vld [vmem:[%s179 + $0x40] sm:$0xff]
        %v225 = vld [vmem:[%s179 + $0x48] sm:$0xff]
        %v226 = vld [vmem:[%s179 + $0x50] sm:$0xff]
        %v227 = vld [vmem:[%s179 + $0x58] sm:$0xff]
        %v228 = vld [vmem:[%s179 + $0x60] sm:$0xff]
        %v229 = vld [vmem:[%s179 + $0x68] sm:$0xff]
        %v230 = vld [vmem:[%s179 + $0x70] sm:$0xff]
        %v231 = vld [vmem:[%s179 + $0x78] sm:$0xff]
        %v232 = vld [vmem:[%s179 + $0x80] sm:$0xff]
        %v233 = vld [vmem:[%s179 + $0x88] sm:$0xff]
        %v234 = vld [vmem:[%s179 + $0x90] sm:$0xff]
        %v235 = vld [vmem:[%s179 + $0x98] sm:$0xff]
        %v236 = vld [vmem:[%s179 + $0xa0] sm:$0xff]
        %v237 = vld [vmem:[%s179 + $0xa8] sm:$0xff]
        %v238 = vld [vmem:[%s179 + $0xb0] sm:$0xff]
        %v239 = vld [vmem:[%s179 + $0xb8] sm:$0xff]
        %v240 = vld [vmem:[%s179 + $0xc0] sm:$0xff]
        %v241 = vld [vmem:[%s179 + $0xc8] sm:$0xff]
        %v242 = vld [vmem:[%s179 + $0xd0] sm:$0xff]
        %v243 = vld [vmem:[%s179 + $0xd8] sm:$0xff]
        %v244 = vld [vmem:[%s179 + $0xe0] sm:$0xff]
        %v245 = vld [vmem:[%s179 + $0xe8] sm:$0xff]
        %v246 = vld [vmem:[%s179 + $0xf0] sm:$0xff]
        %v247 = vld [vmem:[%s179 + $0xf8] sm:$0xff]
        %v248 = vld [vmem:[%s179 + $0x100] sm:$0xff]
        %v249 = vld [vmem:[%s179 + $0x108] sm:$0xff]
        %v250 = vld [vmem:[%s179 + $0x110] sm:$0xff]
        %v251 = vld [vmem:[%s179 + $0x118] sm:$0xff]
        %v252 = vld [vmem:[%s179 + $0x120] sm:$0xff]
        %v253 = vld [vmem:[%s179 + $0x128] sm:$0xff]
        %v254 = vld [vmem:[%s179 + $0x130] sm:$0xff]
        %v255 = vld [vmem:[%s179 + $0x138] sm:$0xff]
        %v256 = vld [vmem:[%s179 + $0x140] sm:$0xff]
        %v257 = vld [vmem:[%s179 + $0x148] sm:$0xff]
        %v258 = vld [vmem:[%s179 + $0x150] sm:$0xff]
        %v259 = vld [vmem:[%s179 + $0x158] sm:$0xff]
        %v260 = vld [vmem:[%s179 + $0x160] sm:$0xff]
        %v261 = vld [vmem:[%s179 + $0x168] sm:$0xff]
        %v262 = vld [vmem:[%s179 + $0x170] sm:$0xff]
        %v263 = vld [vmem:[%s179 + $0x178] sm:$0xff]
        %v264 = vld [vmem:[%s179 + $0x180] sm:$0xff]
        %v265 = vld [vmem:[%s179 + $0x188] sm:$0xff]
        %v266 = vld [vmem:[%s179 + $0x190] sm:$0xff]
        %v267 = vld [vmem:[%s179 + $0x198] sm:$0xff]
        %v268 = vld [vmem:[%s179 + $0x1a0] sm:$0xff]
        %v269 = vld [vmem:[%s179 + $0x1a8] sm:$0xff]
        %v270 = vld [vmem:[%s179 + $0x1b0] sm:$0xff]
        %v271 = vld [vmem:[%s179 + $0x1b8] sm:$0xff]
        %v272 = vld [vmem:[%s179 + $0x1c0] sm:$0xff]
        %v273 = vld [vmem:[%s179 + $0x1c8] sm:$0xff]
        %v274 = vld [vmem:[%s179 + $0x1d0] sm:$0xff]
        %v275 = vld [vmem:[%s179 + $0x1d8] sm:$0xff]
        %v276 = vld [vmem:[%s179 + $0x1e0] sm:$0xff]
        %v277 = vld [vmem:[%s179 + $0x1e8] sm:$0xff]
        %v278 = vld [vmem:[%s179 + $0x1f0] sm:$0xff]
        %v279 = vld [vmem:[%s179 + $0x1f8] sm:$0xff]
        %v280 = vld [vmem:[%s179 + $0x200] sm:$0xff]
        %v281 = vld [vmem:[%s179 + $0x208] sm:$0xff]
        %v282 = vld [vmem:[%s179 + $0x210] sm:$0xff]
        %v283 = vld [vmem:[%s179 + $0x218] sm:$0xff]
        %v284 = vld [vmem:[%s179 + $0x220] sm:$0xff]
        %v285 = vld [vmem:[%s179 + $0x228] sm:$0xff]
        %v286 = vld [vmem:[%s179 + $0x230] sm:$0xff]
        %v287 = vld [vmem:[%s179 + $0x238] sm:$0xff]
        %v288 = vld [vmem:[%s179 + $0x240] sm:$0xff]
        %v289 = vld [vmem:[%s179 + $0x248] sm:$0xff]
        %v290 = vld [vmem:[%s179 + $0x250] sm:$0xff]
        %v291 = vld [vmem:[%s179 + $0x258] sm:$0xff]
        %v292 = vld [vmem:[%s179 + $0x260] sm:$0xff]
        %v293 = vld [vmem:[%s179 + $0x268] sm:$0xff]
        %v294 = vld [vmem:[%s179 + $0x270] sm:$0xff]
        %v295 = vld [vmem:[%s179 + $0x278] sm:$0xff]
        %v296 = vld [vmem:[%s179 + $0x280] sm:$0xff]
        %v297 = vld [vmem:[%s179 + $0x288] sm:$0xff]
        %v298 = vld [vmem:[%s179 + $0x290] sm:$0xff]
        %v299 = vld [vmem:[%s179 + $0x298] sm:$0xff]
        %v300 = vld [vmem:[%s179 + $0x2a0] sm:$0xff]
        %v301 = vld [vmem:[%s179 + $0x2a8] sm:$0xff]
        %v302 = vld [vmem:[%s179 + $0x2b0] sm:$0xff]
        %v303 = vld [vmem:[%s179 + $0x2b8] sm:$0xff]
        %v304 = vld [vmem:[%s179 + $0x2c0] sm:$0xff]
        %v305 = vld [vmem:[%s179 + $0x2c8] sm:$0xff]
        %v306 = vld [vmem:[%s179 + $0x2d0] sm:$0xff]
        %v307 = vld [vmem:[%s179 + $0x2d8] sm:$0xff]
        %v308 = vld [vmem:[%s179 + $0x2e0] sm:$0xff]
        %v309 = vld [vmem:[%s179 + $0x2e8] sm:$0xff]
        %v310 = vld [vmem:[%s179 + $0x2f0] sm:$0xff]
        %v311 = vld [vmem:[%s179 + $0x2f8] sm:$0xff]
        %v312 = vld [vmem:[%s179 + $0x300] sm:$0xff]
        %v313 = vld [vmem:[%s179 + $0x308] sm:$0xff]
        %v314 = vld [vmem:[%s179 + $0x310] sm:$0xff]
        %v315 = vld [vmem:[%s179 + $0x318] sm:$0xff]
        %v316 = vld [vmem:[%s179 + $0x320] sm:$0xff]
        %v317 = vld [vmem:[%s179 + $0x328] sm:$0xff]
        %v318 = vld [vmem:[%s179 + $0x330] sm:$0xff]
        %v319 = vld [vmem:[%s179 + $0x338] sm:$0xff]
        %v320 = vld [vmem:[%s179 + $0x340] sm:$0xff]
        %v321 = vld [vmem:[%s179 + $0x348] sm:$0xff]
        %v322 = vld [vmem:[%s179 + $0x350] sm:$0xff]
        %v323 = vld [vmem:[%s179 + $0x358] sm:$0xff]
        %v324 = vld [vmem:[%s179 + $0x360] sm:$0xff]
        %v325 = vld [vmem:[%s179 + $0x368] sm:$0xff]
        %v326 = vld [vmem:[%s179 + $0x370] sm:$0xff]
        %v327 = vld [vmem:[%s179 + $0x378] sm:$0xff]
        %v328 = vld [vmem:[%s179 + $0x380] sm:$0xff]
        %v329 = vld [vmem:[%s179 + $0x388] sm:$0xff]
        %v330 = vld [vmem:[%s179 + $0x390] sm:$0xff]
        %v331 = vld [vmem:[%s179 + $0x398] sm:$0xff]
        %v332 = vld [vmem:[%s179 + $0x3a0] sm:$0xff]
        %v333 = vld [vmem:[%s179 + $0x3a8] sm:$0xff]
        %v334 = vld [vmem:[%s179 + $0x3b0] sm:$0xff]
        %v335 = vld [vmem:[%s179 + $0x3b8] sm:$0xff]
        %v336 = vld [vmem:[%s179 + $0x3c0] sm:$0xff]
        %v337 = vld [vmem:[%s179 + $0x3c8] sm:$0xff]
        %v338 = vld [vmem:[%s179 + $0x3d0] sm:$0xff]
        %v339 = vld [vmem:[%s179 + $0x3d8] sm:$0xff]
        %v340 = vld [vmem:[%s179 + $0x3e0] sm:$0xff]
        %v341 = vld [vmem:[%s179 + $0x3e8] sm:$0xff]
        %v342 = vld [vmem:[%s179 + $0x3f0] sm:$0xff]
        %v343 = vld [vmem:[%s179 + $0x3f8] sm:$0xff]
        %v344 = vld [vmem:[%s179 + $0x400] sm:$0xff]
        %v345 = vld [vmem:[%s179 + $0x408] sm:$0xff]
        %v346 = vld [vmem:[%s179 + $0x410] sm:$0xff]
        %v347 = vld [vmem:[%s179 + $0x418] sm:$0xff]
        %v348 = vld [vmem:[%s179 + $0x420] sm:$0xff]
        %v349 = vld [vmem:[%s179 + $0x428] sm:$0xff]
        %v350 = vld [vmem:[%s179 + $0x430] sm:$0xff]
        %v351 = vld [vmem:[%s179 + $0x438] sm:$0xff]
        %v352 = vld [vmem:[%s179 + $0x440] sm:$0xff]
        %v353 = vld [vmem:[%s179 + $0x448] sm:$0xff]
        %v354 = vld [vmem:[%s179 + $0x450] sm:$0xff]
        %v355 = vld [vmem:[%s179 + $0x458] sm:$0xff]
        %v356 = vld [vmem:[%s179 + $0x460] sm:$0xff]
        %v357 = vld [vmem:[%s179 + $0x468] sm:$0xff]
        %v358 = vld [vmem:[%s179 + $0x470] sm:$0xff]
        %v359 = vld [vmem:[%s179 + $0x478] sm:$0xff]
        %v360 = vld [vmem:[%s179 + $0x480] sm:$0xff]
        %v361 = vld [vmem:[%s179 + $0x488] sm:$0xff]
        %v362 = vld [vmem:[%s179 + $0x490] sm:$0xff]
        %v363 = vld [vmem:[%s179 + $0x498] sm:$0xff]
        %v364 = vld [vmem:[%s179 + $0x4a0] sm:$0xff]
        %v365 = vld [vmem:[%s179 + $0x4a8] sm:$0xff]
        %v366 = vld [vmem:[%s179 + $0x4b0] sm:$0xff]
        %v367 = vld [vmem:[%s179 + $0x4b8] sm:$0xff]
        %v368 = vld [vmem:[%s179 + $0x4c0] sm:$0xff]
        %v369 = vld [vmem:[%s179 + $0x4c8] sm:$0xff]
        %v370 = vld [vmem:[%s179 + $0x4d0] sm:$0xff]
        %v371 = vld [vmem:[%s179 + $0x4d8] sm:$0xff]
        %v372 = vld [vmem:[%s179 + $0x4e0] sm:$0xff]
        %v373 = vld [vmem:[%s179 + $0x4e8] sm:$0xff]
        %v374 = vld [vmem:[%s179 + $0x4f0] sm:$0xff]
        %v375 = vld [vmem:[%s179 + $0x4f8] sm:$0xff]
        %v376 = vld [vmem:[%s179 + $0x500] sm:$0xff]
        %v377 = vld [vmem:[%s179 + $0x508] sm:$0xff]
        %v378 = vld [vmem:[%s179 + $0x510] sm:$0xff]
        %v379 = vld [vmem:[%s179 + $0x518] sm:$0xff]
        %v380 = vld [vmem:[%s179 + $0x520] sm:$0xff]
        %v381 = vld [vmem:[%s179 + $0x528] sm:$0xff]
        %v382 = vld [vmem:[%s179 + $0x530] sm:$0xff]
        %v383 = vld [vmem:[%s179 + $0x538] sm:$0xff]
        %v384 = vld [vmem:[%s179 + $0x540] sm:$0xff]
        %v385 = vld [vmem:[%s179 + $0x548] sm:$0xff]
        %v386 = vld [vmem:[%s179 + $0x550] sm:$0xff]
        %v387 = vld [vmem:[%s179 + $0x558] sm:$0xff]
        %v388 = vld [vmem:[%s179 + $0x560] sm:$0xff]
        %v389 = vld [vmem:[%s179 + $0x568] sm:$0xff]
        %v390 = vld [vmem:[%s179 + $0x570] sm:$0xff]
        %v391 = vld [vmem:[%s179 + $0x578] sm:$0xff]
        %v392 = vld [vmem:[%s179 + $0x580] sm:$0xff]
        %v393 = vld [vmem:[%s179 + $0x588] sm:$0xff]
        %v394 = vld [vmem:[%s179 + $0x590] sm:$0xff]
        %v395 = vld [vmem:[%s179 + $0x598] sm:$0xff]
        %v396 = vld [vmem:[%s179 + $0x5a0] sm:$0xff]
        %v397 = vld [vmem:[%s179 + $0x5a8] sm:$0xff]
        %v398 = vld [vmem:[%s179 + $0x5b0] sm:$0xff]
        %v399 = vld [vmem:[%s179 + $0x5b8] sm:$0xff]
        %v400 = vld [vmem:[%s179 + $0x5c0] sm:$0xff]
        %v401 = vld [vmem:[%s179 + $0x5c8] sm:$0xff]
        %v402 = vld [vmem:[%s179 + $0x5d0] sm:$0xff]
        %v403 = vld [vmem:[%s179 + $0x5d8] sm:$0xff]
        %v404 = vld [vmem:[%s179 + $0x5e0] sm:$0xff]
        %v405 = vld [vmem:[%s179 + $0x5e8] sm:$0xff]
        %v406 = vld [vmem:[%s179 + $0x5f0] sm:$0xff]
        %v407 = vld [vmem:[%s179 + $0x5f8] sm:$0xff]
        %v408 = vld [vmem:[%s179 + $0x600] sm:$0xff]
        %v409 = vld [vmem:[%s179 + $0x608] sm:$0xff]
        %v410 = vld [vmem:[%s179 + $0x610] sm:$0xff]
        %v411 = vld [vmem:[%s179 + $0x618] sm:$0xff]
        %v412 = vld [vmem:[%s179 + $0x620] sm:$0xff]
        %v413 = vld [vmem:[%s179 + $0x628] sm:$0xff]
        %v414 = vld [vmem:[%s179 + $0x630] sm:$0xff]
        %v415 = vld [vmem:[%s179 + $0x638] sm:$0xff]
        %v416 = vld [vmem:[%s179 + $0x640] sm:$0xff]
        %v417 = vld [vmem:[%s179 + $0x648] sm:$0xff]
        %v418 = vld [vmem:[%s179 + $0x650] sm:$0xff]
        %v419 = vld [vmem:[%s179 + $0x658] sm:$0xff]
        %v420 = vld [vmem:[%s179 + $0x660] sm:$0xff]
        %v421 = vld [vmem:[%s179 + $0x668] sm:$0xff]
        %v422 = vld [vmem:[%s179 + $0x670] sm:$0xff]
        %v423 = vld [vmem:[%s179 + $0x678] sm:$0xff]
        %v424 = vld [vmem:[%s179 + $0x680] sm:$0xff]
        %v425 = vld [vmem:[%s179 + $0x688] sm:$0xff]
        %v426 = vld [vmem:[%s179 + $0x690] sm:$0xff]
        %v427 = vld [vmem:[%s179 + $0x698] sm:$0xff]
        %v428 = vld [vmem:[%s179 + $0x6a0] sm:$0xff]
        %v429 = vld [vmem:[%s179 + $0x6a8] sm:$0xff]
        %v430 = vld [vmem:[%s179 + $0x6b0] sm:$0xff]
        %v431 = vld [vmem:[%s179 + $0x6b8] sm:$0xff]
        %v432 = vld [vmem:[%s179 + $0x6c0] sm:$0xff]
        %v433 = vld [vmem:[%s179 + $0x6c8] sm:$0xff]
        %v434 = vld [vmem:[%s179 + $0x6d0] sm:$0xff]
        %v435 = vld [vmem:[%s179 + $0x6d8] sm:$0xff]
        %v436 = vld [vmem:[%s179 + $0x6e0] sm:$0xff]
        %v437 = vld [vmem:[%s179 + $0x6e8] sm:$0xff]
        %v438 = vld [vmem:[%s179 + $0x6f0] sm:$0xff]
        %v439 = vld [vmem:[%s179 + $0x6f8] sm:$0xff]
        %v440 = vld [vmem:[%s179 + $0x700] sm:$0xff]
        %v441 = vld [vmem:[%s179 + $0x708] sm:$0xff]
        %v442 = vld [vmem:[%s179 + $0x710] sm:$0xff]
        %v443 = vld [vmem:[%s179 + $0x718] sm:$0xff]
        %v444 = vld [vmem:[%s179 + $0x720] sm:$0xff]
        %v445 = vld [vmem:[%s179 + $0x728] sm:$0xff]
        %v446 = vld [vmem:[%s179 + $0x730] sm:$0xff]
        %v447 = vld [vmem:[%s179 + $0x738] sm:$0xff]
        %v448 = vld [vmem:[%s179 + $0x740] sm:$0xff]
        %v449 = vld [vmem:[%s179 + $0x748] sm:$0xff]
        %v450 = vld [vmem:[%s179 + $0x750] sm:$0xff]
        %v451 = vld [vmem:[%s179 + $0x758] sm:$0xff]
        %v452 = vld [vmem:[%s179 + $0x760] sm:$0xff]
        %v453 = vld [vmem:[%s179 + $0x768] sm:$0xff]
        %v454 = vld [vmem:[%s179 + $0x770] sm:$0xff]
        %v455 = vld [vmem:[%s179 + $0x778] sm:$0xff]
        %v456 = vld [vmem:[%s179 + $0x780] sm:$0xff]
        %v457 = vld [vmem:[%s179 + $0x788] sm:$0xff]
        %v458 = vld [vmem:[%s179 + $0x790] sm:$0xff]
        %v459 = vld [vmem:[%s179 + $0x798] sm:$0xff]
        %v460 = vld [vmem:[%s179 + $0x7a0] sm:$0xff]
        %v461 = vld [vmem:[%s179 + $0x7a8] sm:$0xff]
        %v462 = vld [vmem:[%s179 + $0x7b0] sm:$0xff]
        %v463 = vld [vmem:[%s179 + $0x7b8] sm:$0xff]
        %v464 = vld [vmem:[%s179 + $0x7c0] sm:$0xff]
        %v465 = vld [vmem:[%s179 + $0x7c8] sm:$0xff]
        %v466 = vld [vmem:[%s179 + $0x7d0] sm:$0xff]
        %v467 = vld [vmem:[%s179 + $0x7d8] sm:$0xff]
        %v468 = vld [vmem:[%s179 + $0x7e0] sm:$0xff]
        %v469 = vld [vmem:[%s179 + $0x7e8] sm:$0xff]
        %v470 = vld [vmem:[%s179 + $0x7f0] sm:$0xff]
        %v471 = vld [vmem:[%s179 + $0x7f8] sm:$0xff]
        %v472 = vld [vmem:[%s179 + $0x800] sm:$0xff]
        %v473 = vld [vmem:[%s179 + $0x808] sm:$0xff]
        %v474 = vld [vmem:[%s179 + $0x810] sm:$0xff]
        %v475 = vld [vmem:[%s179 + $0x818] sm:$0xff]
        %v476 = vld [vmem:[%s179 + $0x820] sm:$0xff]
        %v477 = vld [vmem:[%s179 + $0x828] sm:$0xff]
        %v478 = vld [vmem:[%s179 + $0x830] sm:$0xff]
        %v479 = vld [vmem:[%s179 + $0x838] sm:$0xff]
        %v480 = vld [vmem:[%s179 + $0x840] sm:$0xff]
        %v481 = vld [vmem:[%s179 + $0x848] sm:$0xff]
        %v482 = vld [vmem:[%s179 + $0x850] sm:$0xff]
        %v483 = vld [vmem:[%s179 + $0x858] sm:$0xff]
        %v484 = vld [vmem:[%s179 + $0x860] sm:$0xff]
        %v485 = vld [vmem:[%s179 + $0x868] sm:$0xff]
        %v486 = vld [vmem:[%s179 + $0x870] sm:$0xff]
        %v487 = vld [vmem:[%s179 + $0x878] sm:$0xff]
        %v488 = vld [vmem:[%s179 + $0x880] sm:$0xff]
        %v489 = vld [vmem:[%s179 + $0x888] sm:$0xff]
        %v490 = vld [vmem:[%s179 + $0x890] sm:$0xff]
        %v491 = vld [vmem:[%s179 + $0x898] sm:$0xff]
        %v492 = vld [vmem:[%s179 + $0x8a0] sm:$0xff]
        %v493 = vld [vmem:[%s179 + $0x8a8] sm:$0xff]
        %v494 = vld [vmem:[%s179 + $0x8b0] sm:$0xff]
        %v495 = vld [vmem:[%s179 + $0x8b8] sm:$0xff]
        %v496 = vld [vmem:[%s179 + $0x8c0] sm:$0xff]
        %v497 = vld [vmem:[%s179 + $0x8c8] sm:$0xff]
        %v498 = vld [vmem:[%s179 + $0x8d0] sm:$0xff]
        %v499 = vld [vmem:[%s179 + $0x8d8] sm:$0xff]
        %v500 = vld [vmem:[%s179 + $0x8e0] sm:$0xff]
        %v501 = vld [vmem:[%s179 + $0x8e8] sm:$0xff]
        %v502 = vld [vmem:[%s179 + $0x8f0] sm:$0xff]
        %v503 = vld [vmem:[%s179 + $0x8f8] sm:$0xff]
        %v504 = vld [vmem:[%s179 + $0x900] sm:$0xff]
        %v505 = vld [vmem:[%s179 + $0x908] sm:$0xff]
        %v506 = vld [vmem:[%s179 + $0x910] sm:$0xff]
        %v507 = vld [vmem:[%s179 + $0x918] sm:$0xff]
        %v508 = vld [vmem:[%s179 + $0x920] sm:$0xff]
        %v509 = vld [vmem:[%s179 + $0x928] sm:$0xff]
        %v510 = vld [vmem:[%s179 + $0x930] sm:$0xff]
        %v511 = vld [vmem:[%s179 + $0x938] sm:$0xff]
        %v512 = vld [vmem:[%s179 + $0x940] sm:$0xff]
        %v513 = vld [vmem:[%s179 + $0x948] sm:$0xff]
        %v514 = vld [vmem:[%s179 + $0x950] sm:$0xff]
        %v515 = vld [vmem:[%s179 + $0x958] sm:$0xff]
        %v516 = vld [vmem:[%s179 + $0x960] sm:$0xff]
        %v517 = vld [vmem:[%s179 + $0x968] sm:$0xff]
        %v518 = vld [vmem:[%s179 + $0x970] sm:$0xff]
        %v519 = vld [vmem:[%s179 + $0x978] sm:$0xff]
        %v520 = vld [vmem:[%s179 + $0x980] sm:$0xff]
        %v521 = vld [vmem:[%s179 + $0x988] sm:$0xff]
        %v522 = vld [vmem:[%s179 + $0x990] sm:$0xff]
        %v523 = vld [vmem:[%s179 + $0x998] sm:$0xff]
        %v524 = vld [vmem:[%s179 + $0x9a0] sm:$0xff]
        %v525 = vld [vmem:[%s179 + $0x9a8] sm:$0xff]
        %v526 = vld [vmem:[%s179 + $0x9b0] sm:$0xff]
        %v527 = vld [vmem:[%s179 + $0x9b8] sm:$0xff]
        %v528 = vld [vmem:[%s179 + $0x9c0] sm:$0xff]
        %v529 = vld [vmem:[%s179 + $0x9c8] sm:$0xff]
        %v530 = vld [vmem:[%s179 + $0x9d0] sm:$0xff]
        %v531 = vld [vmem:[%s179 + $0x9d8] sm:$0xff]
        %v532 = vld [vmem:[%s179 + $0x9e0] sm:$0xff]
        %v533 = vld [vmem:[%s179 + $0x9e8] sm:$0xff]
        %v534 = vld [vmem:[%s179 + $0x9f0] sm:$0xff]
        %v535 = vld [vmem:[%s179 + $0x9f8] sm:$0xff]
        %v536 = vld [vmem:[%s179 + $0xa00] sm:$0xff]
        %v537 = vld [vmem:[%s179 + $0xa08] sm:$0xff]
        %v538 = vld [vmem:[%s179 + $0xa10] sm:$0xff]
        %v539 = vld [vmem:[%s179 + $0xa18] sm:$0xff]
        %v540 = vld [vmem:[%s179 + $0xa20] sm:$0xff]
        %v541 = vld [vmem:[%s179 + $0xa28] sm:$0xff]
        %v542 = vld [vmem:[%s179 + $0xa30] sm:$0xff]
        %v543 = vld [vmem:[%s179 + $0xa38] sm:$0xff]
        %v544 = vld [vmem:[%s179 + $0xa40] sm:$0xff]
        %v545 = vld [vmem:[%s179 + $0xa48] sm:$0xff]
        %v546 = vld [vmem:[%s179 + $0xa50] sm:$0xff]
        %v547 = vld [vmem:[%s179 + $0xa58] sm:$0xff]
        %v548 = vld [vmem:[%s179 + $0xa60] sm:$0xff]
        %v549 = vld [vmem:[%s179 + $0xa68] sm:$0xff]
        %v550 = vld [vmem:[%s179 + $0xa70] sm:$0xff]
        %v551 = vld [vmem:[%s179 + $0xa78] sm:$0xff]
        %v552 = vld [vmem:[%s179 + $0xa80] sm:$0xff]
        %v553 = vld [vmem:[%s179 + $0xa88] sm:$0xff]
        %v554 = vld [vmem:[%s179 + $0xa90] sm:$0xff]
        %v555 = vld [vmem:[%s179 + $0xa98] sm:$0xff]
        %v556 = vld [vmem:[%s179 + $0xaa0] sm:$0xff]
        %v557 = vld [vmem:[%s179 + $0xaa8] sm:$0xff]
        %v558 = vld [vmem:[%s179 + $0xab0] sm:$0xff]
        %v559 = vld [vmem:[%s179 + $0xab8] sm:$0xff]
        %v560 = vld [vmem:[%s179 + $0xac0] sm:$0xff]
        %v561 = vld [vmem:[%s179 + $0xac8] sm:$0xff]
        %v562 = vld [vmem:[%s179 + $0xad0] sm:$0xff]
        %v563 = vld [vmem:[%s179 + $0xad8] sm:$0xff]
        %v564 = vld [vmem:[%s179 + $0xae0] sm:$0xff]
        %v565 = vld [vmem:[%s179 + $0xae8] sm:$0xff]
        %v566 = vld [vmem:[%s179 + $0xaf0] sm:$0xff]
        %v567 = vld [vmem:[%s179 + $0xaf8] sm:$0xff]
        %v568 = vld [vmem:[%s179 + $0xb00] sm:$0xff]
        %v569 = vld [vmem:[%s179 + $0xb08] sm:$0xff]
        %v570 = vld [vmem:[%s179 + $0xb10] sm:$0xff]
        %v571 = vld [vmem:[%s179 + $0xb18] sm:$0xff]
        %v572 = vld [vmem:[%s179 + $0xb20] sm:$0xff]
        %v573 = vld [vmem:[%s179 + $0xb28] sm:$0xff]
        %v574 = vld [vmem:[%s179 + $0xb30] sm:$0xff]
        %v575 = vld [vmem:[%s179 + $0xb38] sm:$0xff]
        %v576 = vld [vmem:[%s179 + $0xb40] sm:$0xff]
        %v577 = vld [vmem:[%s179 + $0xb48] sm:$0xff]
        %v578 = vld [vmem:[%s179 + $0xb50] sm:$0xff]
        %v579 = vld [vmem:[%s179 + $0xb58] sm:$0xff]
        %v580 = vld [vmem:[%s179 + $0xb60] sm:$0xff]
        %v581 = vld [vmem:[%s179 + $0xb68] sm:$0xff]
        %v582 = vld [vmem:[%s179 + $0xb70] sm:$0xff]
        %v583 = vld [vmem:[%s179 + $0xb78] sm:$0xff]
        %v584 = vld [vmem:[%s179 + $0xb80] sm:$0xff]
        %v585 = vld [vmem:[%s179 + $0xb88] sm:$0xff]
        %v586 = vld [vmem:[%s179 + $0xb90] sm:$0xff]
        %v587 = vld [vmem:[%s179 + $0xb98] sm:$0xff]
        %v588 = vld [vmem:[%s179 + $0xba0] sm:$0xff]
        %v589 = vld [vmem:[%s179 + $0xba8] sm:$0xff]
        %v590 = vld [vmem:[%s179 + $0xbb0] sm:$0xff]
        %v591 = vld [vmem:[%s179 + $0xbb8] sm:$0xff]
        %v592 = vld [vmem:[%s179 + $0xbc0] sm:$0xff]
        %v593 = vld [vmem:[%s179 + $0xbc8] sm:$0xff]
        %v594 = vld [vmem:[%s179 + $0xbd0] sm:$0xff]
        %v595 = vld [vmem:[%s179 + $0xbd8] sm:$0xff]
        %v596 = vld [vmem:[%s179 + $0xbe0] sm:$0xff]
        %v597 = vld [vmem:[%s179 + $0xbe8] sm:$0xff]
        %v598 = vld [vmem:[%s179 + $0xbf0] sm:$0xff]
        %v599 = vld [vmem:[%s179 + $0xbf8] sm:$0xff]
        %600 = vmatprep.subr.mxu0 %v217
        %601 = vmatpush1.msra.mxu0 %v216
        %602 = vmatprep.subr.mxu0 %v221
        %603 = vmatpush1.msra.mxu0 %v220
        %604 = vmatprep.subr.mxu0 %v225
        %605 = vmatpush1.msra.mxu0 %v224
        %606 = vmatprep.subr.mxu0 %v229
        %607 = vmatpush1.msra.mxu0 %v228
        %608 = vmatprep.subr.mxu0 %v233
        %609 = vmatpush1.msra.mxu0 %v232
        %610 = vmatprep.subr.mxu0 %v237
        %611 = vmatpush1.msra.mxu0 %v236
        %612 = vmatprep.subr.mxu0 %v241
        %613 = vmatpush1.msra.mxu0 %v240
        %614 = vmatprep.subr.mxu0 %v245
        %615 = vmatpush1.msra.mxu0 %v244
        %616 = vmatprep.subr.mxu0 %v249
        %617 = vmatpush1.msra.mxu0 %v248
        %618 = vmatprep.subr.mxu0 %v253
        %619 = vmatpush1.msra.mxu0 %v252
        %620 = vmatprep.subr.mxu0 %v257
        %621 = vmatpush1.msra.mxu0 %v256
        %622 = vmatprep.subr.mxu0 %v261
        %623 = vmatpush1.msra.mxu0 %v260
        %624 = vmatprep.subr.mxu0 %v265
        %625 = vmatpush1.msra.mxu0 %v264
        %626 = vmatprep.subr.mxu0 %v269
        %627 = vmatpush1.msra.mxu0 %v268
        %628 = vmatprep.subr.mxu0 %v273
        %629 = vmatpush1.msra.mxu0 %v272
        %630 = vmatprep.subr.mxu0 %v277
        %631 = vmatpush1.msra.mxu0 %v276
        %632 = vmatprep.subr.mxu0 %v281
        %633 = vmatpush1.msra.mxu0 %v280
        %634 = vmatprep.subr.mxu0 %v285
        %635 = vmatpush1.msra.mxu0 %v284
        %636 = vmatprep.subr.mxu0 %v289
        %637 = vmatpush1.msra.mxu0 %v288
        %638 = vmatprep.subr.mxu0 %v293
        %639 = vmatpush1.msra.mxu0 %v292
        %640 = vmatprep.subr.mxu0 %v297
        %641 = vmatpush1.msra.mxu0 %v296
        %642 = vmatprep.subr.mxu0 %v301
        %643 = vmatpush1.msra.mxu0 %v300
        %644 = vmatprep.subr.mxu0 %v305
        %645 = vmatpush1.msra.mxu0 %v304
        %646 = vmatprep.subr.mxu0 %v309
        %647 = vmatpush1.msra.mxu0 %v308
        %648 = vmatprep.subr.mxu0 %v313
        %649 = vmatpush1.msra.mxu0 %v312
        %650 = vmatprep.subr.mxu0 %v317
        %651 = vmatpush1.msra.mxu0 %v316
        %652 = vmatprep.subr.mxu0 %v321
        %653 = vmatpush1.msra.mxu0 %v320
        %654 = vmatprep.subr.mxu0 %v325
        %655 = vmatpush1.msra.mxu0 %v324
        %656 = vmatprep.subr.mxu0 %v329
        %657 = vmatpush1.msra.mxu0 %v328
        %658 = vmatprep.subr.mxu0 %v333
        %659 = vmatpush1.msra.mxu0 %v332
        %660 = vmatprep.subr.mxu0 %v337
        %661 = vmatpush1.msra.mxu0 %v336
        %662 = vmatprep.subr.mxu0 %v341
        %663 = vmatpush1.msra.mxu0 %v340
        %664 = vmatprep.mubr.f32.mxu0 %v205
        %665 = vmatmul.mubr.f32.gmra.mrb[0].mxu0 %v204
        %v666 = vpop.f32.mrb[0].mxu0
        %v667 = vadd.f32 0.0, %v666
        %v668 = vpop.f32.mrb[0].mxu0
        %v669 = vadd.f32 0.0, %v668
        %670 = vmatprep.mubr.f32.mxu0 %v211
        %671 = vmatmul.mubr.f32.gmra.mrb[0].mxu0 %v210
        %v672 = vpop.f32.mrb[0].mxu0
        %v673 = vadd.f32 0.0, %v672
        %v674 = vpop.f32.mrb[0].mxu0
        %v675 = vadd.f32 0.0, %v674
        %676 = vdwg.mxu0
        %677 = vmatprep.subr.mxu0 %v345
        %678 = vmatpush1.msra.mxu0 %v344
        %679 = vmatprep.subr.mxu0 %v349
        %680 = vmatpush1.msra.mxu0 %v348
        %681 = vmatprep.subr.mxu0 %v353
        %682 = vmatpush1.msra.mxu0 %v352
        %683 = vmatprep.subr.mxu0 %v357
        %684 = vmatpush1.msra.mxu0 %v356
        %685 = vmatprep.subr.mxu0 %v361
        %686 = vmatpush1.msra.mxu0 %v360
        %687 = vmatprep.subr.mxu0 %v365
        %688 = vmatpush1.msra.mxu0 %v364
        %689 = vmatprep.subr.mxu0 %v369
        %690 = vmatpush1.msra.mxu0 %v368
        %691 = vmatprep.subr.mxu0 %v373
        %692 = vmatpush1.msra.mxu0 %v372
        %693 = vmatprep.subr.mxu0 %v377
        %694 = vmatpush1.msra.mxu0 %v376
        %695 = vmatprep.subr.mxu0 %v381
        %696 = vmatpush1.msra.mxu0 %v380
        %697 = vmatprep.subr.mxu0 %v385
        %698 = vmatpush1.msra.mxu0 %v384
        %699 = vmatprep.subr.mxu0 %v389
        %700 = vmatpush1.msra.mxu0 %v388
        %701 = vmatprep.subr.mxu0 %v393
        %702 = vmatpush1.msra.mxu0 %v392
        %703 = vmatprep.subr.mxu0 %v397
        %704 = vmatpush1.msra.mxu0 %v396
        %705 = vmatprep.subr.mxu0 %v401
        %706 = vmatpush1.msra.mxu0 %v400
        %707 = vmatprep.subr.mxu0 %v405
        %708 = vmatpush1.msra.mxu0 %v404
        %709 = vmatprep.subr.mxu0 %v409
        %710 = vmatpush1.msra.mxu0 %v408
        %711 = vmatprep.subr.mxu0 %v413
        %712 = vmatpush1.msra.mxu0 %v412
        %713 = vmatprep.subr.mxu0 %v417
        %714 = vmatpush1.msra.mxu0 %v416
        %715 = vmatprep.subr.mxu0 %v421
        %716 = vmatpush1.msra.mxu0 %v420
        %717 = vmatprep.subr.mxu0 %v425
        %718 = vmatpush1.msra.mxu0 %v424
        %719 = vmatprep.subr.mxu0 %v429
        %720 = vmatpush1.msra.mxu0 %v428
        %721 = vmatprep.subr.mxu0 %v433
        %722 = vmatpush1.msra.mxu0 %v432
        %723 = vmatprep.subr.mxu0 %v437
        %724 = vmatpush1.msra.mxu0 %v436
        %725 = vmatprep.subr.mxu0 %v441
        %726 = vmatpush1.msra.mxu0 %v440
        %727 = vmatprep.subr.mxu0 %v445
        %728 = vmatpush1.msra.mxu0 %v444
        %729 = vmatprep.subr.mxu0 %v449
        %730 = vmatpush1.msra.mxu0 %v448
        %731 = vmatprep.subr.mxu0 %v453
        %732 = vmatpush1.msra.mxu0 %v452
        %733 = vmatprep.subr.mxu0 %v457
        %734 = vmatpush1.msra.mxu0 %v456
        %735 = vmatprep.subr.mxu0 %v461
        %736 = vmatpush1.msra.mxu0 %v460
        %737 = vmatprep.subr.mxu0 %v465
        %738 = vmatpush1.msra.mxu0 %v464
        %739 = vmatprep.subr.mxu0 %v469
        %740 = vmatpush1.msra.mxu0 %v468
        %741 = vmatprep.mubr.f32.mxu0 %v207
        %742 = vmatmul.mubr.f32.gmra.mrb[0].mxu0 %v206
        %v743 = vpop.f32.mrb[0].mxu0
        %v744 = vadd.f32 %v667, %v743
        %v745 = vpop.f32.mrb[0].mxu0
        %v746 = vadd.f32 %v669, %v745
        %747 = vmatprep.mubr.f32.mxu0 %v213
        %748 = vmatmul.mubr.f32.gmra.mrb[0].mxu0 %v212
        %v749 = vpop.f32.mrb[0].mxu0
        %v750 = vadd.f32 %v673, %v749
        %v751 = vpop.f32.mrb[0].mxu0
        %v752 = vadd.f32 %v675, %v751
        %753 = vdwg.mxu0
        %754 = vmatprep.subr.mxu0 %v473
        %755 = vmatpush1.msra.mxu0 %v472
        %756 = vmatprep.subr.mxu0 %v477
        %757 = vmatpush1.msra.mxu0 %v476
        %758 = vmatprep.subr.mxu0 %v481
        %759 = vmatpush1.msra.mxu0 %v480
        %760 = vmatprep.subr.mxu0 %v485
        %761 = vmatpush1.msra.mxu0 %v484
        %762 = vmatprep.subr.mxu0 %v489
        %763 = vmatpush1.msra.mxu0 %v488
        %764 = vmatprep.subr.mxu0 %v493
        %765 = vmatpush1.msra.mxu0 %v492
        %766 = vmatprep.subr.mxu0 %v497
        %767 = vmatpush1.msra.mxu0 %v496
        %768 = vmatprep.subr.mxu0 %v501
        %769 = vmatpush1.msra.mxu0 %v500
        %770 = vmatprep.subr.mxu0 %v505
        %771 = vmatpush1.msra.mxu0 %v504
        %772 = vmatprep.subr.mxu0 %v509
        %773 = vmatpush1.msra.mxu0 %v508
        %774 = vmatprep.subr.mxu0 %v513
        %775 = vmatpush1.msra.mxu0 %v512
        %776 = vmatprep.subr.mxu0 %v517
        %777 = vmatpush1.msra.mxu0 %v516
        %778 = vmatprep.subr.mxu0 %v521
        %779 = vmatpush1.msra.mxu0 %v520
        %780 = vmatprep.subr.mxu0 %v525
        %781 = vmatpush1.msra.mxu0 %v524
        %782 = vmatprep.subr.mxu0 %v529
        %783 = vmatpush1.msra.mxu0 %v528
        %784 = vmatprep.subr.mxu0 %v533
        %785 = vmatpush1.msra.mxu0 %v532
        %786 = vmatprep.subr.mxu0 %v537
        %787 = vmatpush1.msra.mxu0 %v536
        %788 = vmatprep.subr.mxu0 %v541
        %789 = vmatpush1.msra.mxu0 %v540
        %790 = vmatprep.subr.mxu0 %v545
        %791 = vmatpush1.msra.mxu0 %v544
        %792 = vmatprep.subr.mxu0 %v549
        %793 = vmatpush1.msra.mxu0 %v548
        %794 = vmatprep.subr.mxu0 %v553
        %795 = vmatpush1.msra.mxu0 %v552
        %796 = vmatprep.subr.mxu0 %v557
        %797 = vmatpush1.msra.mxu0 %v556
        %798 = vmatprep.subr.mxu0 %v561
        %799 = vmatpush1.msra.mxu0 %v560
        %800 = vmatprep.subr.mxu0 %v565
        %801 = vmatpush1.msra.mxu0 %v564
        %802 = vmatprep.subr.mxu0 %v569
        %803 = vmatpush1.msra.mxu0 %v568
        %804 = vmatprep.subr.mxu0 %v573
        %805 = vmatpush1.msra.mxu0 %v572
        %806 = vmatprep.subr.mxu0 %v577
        %807 = vmatpush1.msra.mxu0 %v576
        %808 = vmatprep.subr.mxu0 %v581
        %809 = vmatpush1.msra.mxu0 %v580
        %810 = vmatprep.subr.mxu0 %v585
        %811 = vmatpush1.msra.mxu0 %v584
        %812 = vmatprep.subr.mxu0 %v589
        %813 = vmatpush1.msra.mxu0 %v588
        %814 = vmatprep.subr.mxu0 %v593
        %815 = vmatpush1.msra.mxu0 %v592
        %816 = vmatprep.subr.mxu0 %v597
        %817 = vmatpush1.msra.mxu0 %v596
        %818 = vmatprep.mubr.f32.mxu0 %v209
        %819 = vmatmul.mubr.f32.gmra.mrb[0].mxu0 %v208
        %v820 = vpop.f32.mrb[0].mxu0
        %v821 = vadd.f32 %v744, %v820
        %v822 = vpop.f32.mrb[0].mxu0
        %v823 = vadd.f32 %v746, %v822
        %824 = vmatprep.mubr.f32.mxu0 %v215
        %825 = vmatmul.mubr.f32.gmra.mrb[0].mxu0 %v214
        %v826 = vpop.f32.mrb[0].mxu0
        %v827 = vadd.f32 %v750, %v826
        %v828 = vpop.f32.mrb[0].mxu0
        %v829 = vadd.f32 %v752, %v828
        %830 = vdwg.mxu0
        %831 = vmatprep.subr.mxu0 %v219
        %832 = vmatpush1.msra.mxu0 %v218
        %833 = vmatprep.subr.mxu0 %v223
        %834 = vmatpush1.msra.mxu0 %v222
        %835 = vmatprep.subr.mxu0 %v227
        %836 = vmatpush1.msra.mxu0 %v226
        %837 = vmatprep.subr.mxu0 %v231
        %838 = vmatpush1.msra.mxu0 %v230
        %839 = vmatprep.subr.mxu0 %v235
        %840 = vmatpush1.msra.mxu0 %v234
        %841 = vmatprep.subr.mxu0 %v239
        %842 = vmatpush1.msra.mxu0 %v238
        %843 = vmatprep.subr.mxu0 %v243
        %844 = vmatpush1.msra.mxu0 %v242
        %845 = vmatprep.subr.mxu0 %v247
        %846 = vmatpush1.msra.mxu0 %v246
        %847 = vmatprep.subr.mxu0 %v251
        %848 = vmatpush1.msra.mxu0 %v250
        %849 = vmatprep.subr.mxu0 %v255
        %850 = vmatpush1.msra.mxu0 %v254
        %851 = vmatprep.subr.mxu0 %v259
        %852 = vmatpush1.msra.mxu0 %v258
        %853 = vmatprep.subr.mxu0 %v263
        %854 = vmatpush1.msra.mxu0 %v262
        %855 = vmatprep.subr.mxu0 %v267
        %856 = vmatpush1.msra.mxu0 %v266
        %857 = vmatprep.subr.mxu0 %v271
        %858 = vmatpush1.msra.mxu0 %v270
        %859 = vmatprep.subr.mxu0 %v275
        %860 = vmatpush1.msra.mxu0 %v274
        %861 = vmatprep.subr.mxu0 %v279
        %862 = vmatpush1.msra.mxu0 %v278
        %863 = vmatprep.subr.mxu0 %v283
        %864 = vmatpush1.msra.mxu0 %v282
        %865 = vmatprep.subr.mxu0 %v287
        %866 = vmatpush1.msra.mxu0 %v286
        %867 = vmatprep.subr.mxu0 %v291
        %868 = vmatpush1.msra.mxu0 %v290
        %869 = vmatprep.subr.mxu0 %v295
        %870 = vmatpush1.msra.mxu0 %v294
        %871 = vmatprep.subr.mxu0 %v299
        %872 = vmatpush1.msra.mxu0 %v298
        %873 = vmatprep.subr.mxu0 %v303
        %874 = vmatpush1.msra.mxu0 %v302
        %875 = vmatprep.subr.mxu0 %v307
        %876 = vmatpush1.msra.mxu0 %v306
        %877 = vmatprep.subr.mxu0 %v311
        %878 = vmatpush1.msra.mxu0 %v310
        %879 = vmatprep.subr.mxu0 %v315
        %880 = vmatpush1.msra.mxu0 %v314
        %881 = vmatprep.subr.mxu0 %v319
        %882 = vmatpush1.msra.mxu0 %v318
        %883 = vmatprep.subr.mxu0 %v323
        %884 = vmatpush1.msra.mxu0 %v322
        %885 = vmatprep.subr.mxu0 %v327
        %886 = vmatpush1.msra.mxu0 %v326
        %887 = vmatprep.subr.mxu0 %v331
        %888 = vmatpush1.msra.mxu0 %v330
        %889 = vmatprep.subr.mxu0 %v335
        %890 = vmatpush1.msra.mxu0 %v334
        %891 = vmatprep.subr.mxu0 %v339
        %892 = vmatpush1.msra.mxu0 %v338
        %893 = vmatprep.subr.mxu0 %v343
        %894 = vmatpush1.msra.mxu0 %v342
        %895 = vmatprep.mubr.f32.mxu0 %v205
        %896 = vmatmul.mubr.f32.gmra.mrb[0].mxu0 %v204
        %v897 = vpop.f32.mrb[0].mxu0
        %v898 = vadd.f32 0.0, %v897
        %v899 = vpop.f32.mrb[0].mxu0
        %v900 = vadd.f32 0.0, %v899
        %901 = vmatprep.mubr.f32.mxu0 %v211
        %902 = vmatmul.mubr.f32.gmra.mrb[0].mxu0 %v210
        %v903 = vpop.f32.mrb[0].mxu0
        %v904 = vadd.f32 0.0, %v903
        %v905 = vpop.f32.mrb[0].mxu0
        %v906 = vadd.f32 0.0, %v905
        %907 = vdwg.mxu0
        %908 = vmatprep.subr.mxu0 %v347
        %909 = vmatpush1.msra.mxu0 %v346
        %910 = vmatprep.subr.mxu0 %v351
        %911 = vmatpush1.msra.mxu0 %v350
        %912 = vmatprep.subr.mxu0 %v355
        %913 = vmatpush1.msra.mxu0 %v354
        %914 = vmatprep.subr.mxu0 %v359
        %915 = vmatpush1.msra.mxu0 %v358
        %916 = vmatprep.subr.mxu0 %v363
        %917 = vmatpush1.msra.mxu0 %v362
        %918 = vmatprep.subr.mxu0 %v367
        %919 = vmatpush1.msra.mxu0 %v366
        %920 = vmatprep.subr.mxu0 %v371
        %921 = vmatpush1.msra.mxu0 %v370
        %922 = vmatprep.subr.mxu0 %v375
        %923 = vmatpush1.msra.mxu0 %v374
        %924 = vmatprep.subr.mxu0 %v379
        %925 = vmatpush1.msra.mxu0 %v378
        %926 = vmatprep.subr.mxu0 %v383
        %927 = vmatpush1.msra.mxu0 %v382
        %928 = vmatprep.subr.mxu0 %v387
        %929 = vmatpush1.msra.mxu0 %v386
        %930 = vmatprep.subr.mxu0 %v391
        %931 = vmatpush1.msra.mxu0 %v390
        %932 = vmatprep.subr.mxu0 %v395
        %933 = vmatpush1.msra.mxu0 %v394
        %934 = vmatprep.subr.mxu0 %v399
        %935 = vmatpush1.msra.mxu0 %v398
        %936 = vmatprep.subr.mxu0 %v403
        %937 = vmatpush1.msra.mxu0 %v402
        %938 = vmatprep.subr.mxu0 %v407
        %939 = vmatpush1.msra.mxu0 %v406
        %940 = vmatprep.subr.mxu0 %v411
        %941 = vmatpush1.msra.mxu0 %v410
        %942 = vmatprep.subr.mxu0 %v415
        %943 = vmatpush1.msra.mxu0 %v414
        %944 = vmatprep.subr.mxu0 %v419
        %945 = vmatpush1.msra.mxu0 %v418
        %946 = vmatprep.subr.mxu0 %v423
        %947 = vmatpush1.msra.mxu0 %v422
        %948 = vmatprep.subr.mxu0 %v427
        %949 = vmatpush1.msra.mxu0 %v426
        %950 = vmatprep.subr.mxu0 %v431
        %951 = vmatpush1.msra.mxu0 %v430
        %952 = vmatprep.subr.mxu0 %v435
        %953 = vmatpush1.msra.mxu0 %v434
        %954 = vmatprep.subr.mxu0 %v439
        %955 = vmatpush1.msra.mxu0 %v438
        %956 = vmatprep.subr.mxu0 %v443
        %957 = vmatpush1.msra.mxu0 %v442
        %958 = vmatprep.subr.mxu0 %v447
        %959 = vmatpush1.msra.mxu0 %v446
        %960 = vmatprep.subr.mxu0 %v451
        %961 = vmatpush1.msra.mxu0 %v450
        %962 = vmatprep.subr.mxu0 %v455
        %963 = vmatpush1.msra.mxu0 %v454
        %964 = vmatprep.subr.mxu0 %v459
        %965 = vmatpush1.msra.mxu0 %v458
        %966 = vmatprep.subr.mxu0 %v463
        %967 = vmatpush1.msra.mxu0 %v462
        %968 = vmatprep.subr.mxu0 %v467
        %969 = vmatpush1.msra.mxu0 %v466
        %970 = vmatprep.subr.mxu0 %v471
        %971 = vmatpush1.msra.mxu0 %v470
        %972 = vmatprep.mubr.f32.mxu0 %v207
        %973 = vmatmul.mubr.f32.gmra.mrb[0].mxu0 %v206
        %v974 = vpop.f32.mrb[0].mxu0
        %v975 = vadd.f32 %v898, %v974
        %v976 = vpop.f32.mrb[0].mxu0
        %v977 = vadd.f32 %v900, %v976
        %978 = vmatprep.mubr.f32.mxu0 %v213
        %979 = vmatmul.mubr.f32.gmra.mrb[0].mxu0 %v212
        %v980 = vpop.f32.mrb[0].mxu0
        %v981 = vadd.f32 %v904, %v980
        %v982 = vpop.f32.mrb[0].mxu0
        %v983 = vadd.f32 %v906, %v982
        %984 = vdwg.mxu0
        %985 = vmatprep.subr.mxu0 %v475
        %986 = vmatpush1.msra.mxu0 %v474
        %987 = vmatprep.subr.mxu0 %v479
        %988 = vmatpush1.msra.mxu0 %v478
        %989 = vmatprep.subr.mxu0 %v483
        %990 = vmatpush1.msra.mxu0 %v482
        %991 = vmatprep.subr.mxu0 %v487
        %992 = vmatpush1.msra.mxu0 %v486
        %993 = vmatprep.subr.mxu0 %v491
        %994 = vmatpush1.msra.mxu0 %v490
        %995 = vmatprep.subr.mxu0 %v495
        %996 = vmatpush1.msra.mxu0 %v494
        %997 = vmatprep.subr.mxu0 %v499
        %998 = vmatpush1.msra.mxu0 %v498
        %999 = vmatprep.subr.mxu0 %v503
        %1000 = vmatpush1.msra.mxu0 %v502
        %1001 = vmatprep.subr.mxu0 %v507
        %1002 = vmatpush1.msra.mxu0 %v506
        %1003 = vmatprep.subr.mxu0 %v511
        %1004 = vmatpush1.msra.mxu0 %v510
        %1005 = vmatprep.subr.mxu0 %v515
        %1006 = vmatpush1.msra.mxu0 %v514
        %1007 = vmatprep.subr.mxu0 %v519
        %1008 = vmatpush1.msra.mxu0 %v518
        %1009 = vmatprep.subr.mxu0 %v523
        %1010 = vmatpush1.msra.mxu0 %v522
        %1011 = vmatprep.subr.mxu0 %v527
        %1012 = vmatpush1.msra.mxu0 %v526
        %1013 = vmatprep.subr.mxu0 %v531
        %1014 = vmatpush1.msra.mxu0 %v530
        %1015 = vmatprep.subr.mxu0 %v535
        %1016 = vmatpush1.msra.mxu0 %v534
        %1017 = vmatprep.subr.mxu0 %v539
        %1018 = vmatpush1.msra.mxu0 %v538
        %1019 = vmatprep.subr.mxu0 %v543
        %1020 = vmatpush1.msra.mxu0 %v542
        %1021 = vmatprep.subr.mxu0 %v547
        %1022 = vmatpush1.msra.mxu0 %v546
        %1023 = vmatprep.subr.mxu0 %v551
        %1024 = vmatpush1.msra.mxu0 %v550
        %1025 = vmatprep.subr.mxu0 %v555
        %1026 = vmatpush1.msra.mxu0 %v554
        %1027 = vmatprep.subr.mxu0 %v559
        %1028 = vmatpush1.msra.mxu0 %v558
        %1029 = vmatprep.subr.mxu0 %v563
        %1030 = vmatpush1.msra.mxu0 %v562
        %1031 = vmatprep.subr.mxu0 %v567
        %1032 = vmatpush1.msra.mxu0 %v566
        %1033 = vmatprep.subr.mxu0 %v571
        %1034 = vmatpush1.msra.mxu0 %v570
        %1035 = vmatprep.subr.mxu0 %v575
        %1036 = vmatpush1.msra.mxu0 %v574
        %1037 = vmatprep.subr.mxu0 %v579
        %1038 = vmatpush1.msra.mxu0 %v578
        %1039 = vmatprep.subr.mxu0 %v583
        %1040 = vmatpush1.msra.mxu0 %v582
        %1041 = vmatprep.subr.mxu0 %v587
        %1042 = vmatpush1.msra.mxu0 %v586
        %1043 = vmatprep.subr.mxu0 %v591
        %1044 = vmatpush1.msra.mxu0 %v590
        %1045 = vmatprep.subr.mxu0 %v595
        %1046 = vmatpush1.msra.mxu0 %v594
        %1047 = vmatprep.subr.mxu0 %v599
        %1048 = vmatpush1.msra.mxu0 %v598
        %1049 = vmatprep.mubr.f32.mxu0 %v209
        %1050 = vmatmul.mubr.f32.gmra.mrb[0].mxu0 %v208
        %v1051 = vpop.f32.mrb[0].mxu0
        %v1052 = vadd.f32 %v975, %v1051
        %v1053 = vpop.f32.mrb[0].mxu0
        %v1054 = vadd.f32 %v977, %v1053
        %1055 = vmatprep.mubr.f32.mxu0 %v215
        %1056 = vmatmul.mubr.f32.gmra.mrb[0].mxu0 %v214
        %v1057 = vpop.f32.mrb[0].mxu0
        %v1058 = vadd.f32 %v981, %v1057
        %v1059 = vpop.f32.mrb[0].mxu0
        %v1060 = vadd.f32 %v983, %v1059
        %1061 = vdwg.mxu0
        %1062 = vst [vmem:[%s199] sm:$0xff] %v821
        %1063 = vst [vmem:[%s199 + $0x8] sm:$0xff] %v823
        %1064 = vst [vmem:[%s199 + $0x10] sm:$0xff] %v1052
        %1065 = vst [vmem:[%s199 + $0x18] sm:$0xff] %v1054
        %1066 = vst [vmem:[%s199 + $0x20] sm:$0xff] %v827
        %1067 = vst [vmem:[%s199 + $0x28] sm:$0xff] %v829
        %1068 = vst [vmem:[%s199 + $0x30] sm:$0xff] %v1058
        %1069 = vst [vmem:[%s199 + $0x38] sm:$0xff] %v1060
        %s1070 = sand.u32 %s94, 1
        %s1071 = scalar_lea.sflag [#allocation4], %s1070
        %s1072 = sand.u32 %s94, 1
        %s1073 = smul.addr %s1072, 64
        %s1074 = scalar_lea.vmem [#allocation7], %s1073
        // Predicated region
        $region37: #{tpu_custom_call.1} parent=27 // pred_check
          %p1075 = pneg %p104
        $region38: #{tpu_custom_call.1} parent=27 // pred_check_branch
          %1077 = sbr.rel (%p1075) target = $region40
        $region39: #{tpu_custom_call.1} parent=27 // pred_region
          %s1078 = smul.u32 2, %s24
          %s1079 = smul.u32 4, %s25
          %s1081 = ssub.s32 1024, 1024
          %1082 = vsyncadd %s1071, %s1081
          %s1083 = smul.addr %s1078, 12
          %s1084 = sadd.s32 %s1079, %s1083
          %s1085 = smul.addr %s1084, 128
          %s1086 = scalar_lea.hbm %s2, %s1085
          %s1087 = sshll.u32 %s1074, 4
          %s1088 = int_to_ptr.vmem [resolvable:$true] %s1087
          %1093 = dma.vmem_to_hbm [thread:$0]  %s1088, 1024, %s1086, %s1071, 512, 1536, 32
        $region40: #{tpu_custom_call.1} parent=27 // pred_fallthru
          _
      $region28: #{tpu_custom_call.1} parent=5 // pred_fallthru
        _
      %p1094 = scmp.le.s32.totalorder 2, %s15
      // Predicated region
      $region41: #{tpu_custom_call.1} parent=5 // pred_check
        %p1095 = pneg %p1094
      $region42: #{tpu_custom_call.1} parent=5 // pred_check_branch
        %1097 = sbr.rel (%p1095) target = $region44
      $region43: #{tpu_custom_call.1} parent=5 // pred_region
        %s1098 = ssub.s32 %s15, 2
        // Predicated region
        $region45: #{tpu_custom_call.1} parent=43 // pred_check
          %p1099 = pneg %p110
        $region46: #{tpu_custom_call.1} parent=43 // pred_check_branch
          %1101 = sbr.rel (%p1099) target = $region48
        $region47: #{tpu_custom_call.1} parent=43 // pred_region
          %s1102 = sand.u32 %s95, 1
          %s1103 = scalar_lea.sflag [#allocation4], %s1102
          %s1104 = sand.u32 %s95, 1
          %s1105 = smul.addr %s1104, 64
          %s1106 = scalar_lea.vmem [#allocation7], %s1105
          %1107 = dma.done %s1103, 1024
        $region48: #{tpu_custom_call.1} parent=43 // pred_fallthru
          _
      $region44: #{tpu_custom_call.1} parent=5 // pred_fallthru
        _
    $region6: #{tpu_custom_call.1} parent=1 // loop_footer
      %s19 = sadd.s32 1, %s15
    $region7: #{tpu_custom_call.1} parent=1 // loop_footer_branch
      %14 = sbr.rel target = $region3
    $region8: #{tpu_custom_call.1} parent=1 // loop_exit
      _
    %1108 = vsyncpa [#allocation3], 1
    %s1109 = scalar_lea.sflag [#allocation3], 1
    %1110 = vsyncpa %s1109, 1
    %1111 = vsyncpa [#allocation6], 1
    %s1112 = scalar_lea.sflag [#allocation6], 1
    %1113 = vsyncpa %s1112, 1
    %1114 = vsyncpa [#allocation4], 1
    %s1115 = scalar_lea.sflag [#allocation4], 1
    %1116 = vsyncpa %s1115, 1

</llo_original>
